<compile_context>
chip_gen: v7x
topology: tpu7x:2x2x1
jax: 0.10.0
libtpu: 0.0.40
codegen_flags: <defaults>
</compile_context>

<pallas_src>
import functools

import jax
import jax.numpy as jnp
from jax.experimental import pallas as pl
from jax.experimental.pallas import tpu as pltpu

NEG = -1e30          # Python float: folded as a jaxpr literal, never captured
LANE = 128


def _round_up(v, m):
    return ((v + m - 1) // m) * m


def _vmem_limit_bytes():
    # v5e/v6e: 128 MiB physical -> ~96 MiB scoped limit; v7x: 64 MiB -> 48 MiB.
    try:
        cap = pltpu.get_tpu_info().vmem_capacity_bytes
    except Exception:
        cap = 64 * 1024 * 1024
    return min(int(cap * 3 // 4), 100 * 1024 * 1024)


# --------------------------------------------------------------------------
# Kernel 1: per-layer hoisted projection (row-tiled, done ONCE per layer)
#   x:[T,F_pad]  w:[F_pad,C_pad]  att_src/att_dst:[1,C_pad]
#   -> xl (bf16) [T,C_pad], a_src_row [1,T], a_dst [T,1]
# --------------------------------------------------------------------------
def _project_kernel(x_ref, w_ref, asrc_ref, adst_ref, xl_ref, arow_ref, acol_ref):
    xl = jnp.dot(x_ref[...], w_ref[...], preferred_element_type=jnp.float32)
    arow_ref[...] = jax.lax.dot_general(
        asrc_ref[...], xl, (((1,), (1,)), ((), ())),
        preferred_element_type=jnp.float32)                          # [1, T]
    acol_ref[...] = jnp.sum(xl * adst_ref[...], axis=-1, keepdims=True)  # [T, 1]
    xl_ref[...] = xl.astype(jnp.bfloat16)                            # bf16 V


def gat_project(x, w, att_src, att_dst, tile_n, vmem_limit):
    n_pad, f_pad = x.shape
    c_pad = w.shape[1]
    grid = (n_pad // tile_n,)
    return pl.pallas_call(
        _project_kernel,
        out_shape=(jax.ShapeDtypeStruct((n_pad, c_pad), jnp.bfloat16),
                   jax.ShapeDtypeStruct((1, n_pad), jnp.float32),
                   jax.ShapeDtypeStruct((n_pad, 1), jnp.float32)),
        grid=grid,
        in_specs=[
            pl.BlockSpec((tile_n, f_pad), lambda i: (i, 0)),   # x rows
            pl.BlockSpec((f_pad, c_pad), lambda i: (0, 0)),    # W
            pl.BlockSpec((1, c_pad), lambda i: (0, 0)),        # att_src
            pl.BlockSpec((1, c_pad), lambda i: (0, 0)),        # att_dst
        ],
        out_specs=(pl.BlockSpec((tile_n, c_pad), lambda i: (i, 0)),
                   pl.BlockSpec((1, tile_n), lambda i: (0, i)),
                   pl.BlockSpec((tile_n, 1), lambda i: (i, 0))),
        compiler_params=pltpu.CompilerParams(
            dimension_semantics=("parallel",),
            vmem_limit_bytes=vmem_limit),
    )(x, w, att_src, att_dst)


# --------------------------------------------------------------------------
# Kernel 2: attention + aggregation + fused ReLU, flash-style online softmax.
#   grid = (N/T_dst [parallel], N/T_src [arbitrary])
#   a_dst:[T_dst,1]  a_src_row:[1,T_src]  xl:[T_src,C_pad] bf16
#   bias:[T_dst,T_src] bf16 (a_edge on edges incl. self loops, -1e30 elsewhere)
#   b:[1,C_pad]
# --------------------------------------------------------------------------
def _gat_attend_kernel(adst_ref, arow_ref, xl_ref, bias_ref, b_ref, o_ref,
                       m_sc, l_sc, acc_sc):
    j = pl.program_id(1)

    @pl.when(j == 0)
    def _():
        m_sc[...] = jnp.full_like(m_sc, NEG)
        l_sc[...] = jnp.zeros_like(l_sc)
        acc_sc[...] = jnp.zeros_like(acc_sc)

    e = adst_ref[...] + arow_ref[...] + bias_ref[...].astype(jnp.float32)
    e = jnp.where(e > 0, e, 0.2 * e)                   # leaky_relu(0.2)

    m_prev = m_sc[...]
    m_new = jnp.maximum(m_prev, jnp.max(e, axis=-1, keepdims=True))
    scale = jnp.exp(m_prev - m_new)
    p = jnp.exp(e - m_new)
    l_sc[...] = scale * l_sc[...] + jnp.sum(p, axis=-1, keepdims=True)
    acc_sc[...] = scale * acc_sc[...] + jnp.dot(
        p.astype(jnp.bfloat16), xl_ref[...], preferred_element_type=jnp.float32)
    m_sc[...] = m_new

    @pl.when(j == pl.num_programs(1) - 1)
    def _():
        out = acc_sc[...] * pl.reciprocal(l_sc[...], approx=True) + b_ref[...]
        o_ref[...] = jnp.maximum(out, 0.0)             # F.relu after conv


def gat_attend(a_dst, a_src_row, xl, bias_mat, b, tile_dst, tile_src, vmem_limit):
    n_pad, c_pad = xl.shape
    grid = (n_pad // tile_dst, n_pad // tile_src)
    # TODO(synk): deeper buffering (pipeline_mode=pl.Buffered(3)) on the bias
    # stream not enabled; needs a trace to confirm the DMA is actually exposed.
    return pl.pallas_call(
        _gat_attend_kernel,
        out_shape=jax.ShapeDtypeStruct((n_pad, c_pad), jnp.float32),
        grid=grid,
        in_specs=[
            pl.BlockSpec((tile_dst, 1), lambda i, j: (i, 0)),         # a_dst
            pl.BlockSpec((1, tile_src), lambda i, j: (0, j)),         # a_src row
            pl.BlockSpec((tile_src, c_pad), lambda i, j: (j, 0)),     # xl (bf16)
            pl.BlockSpec((tile_dst, tile_src), lambda i, j: (i, j)),  # bias+mask (bf16)
            pl.BlockSpec((1, c_pad), lambda i, j: (0, 0)),            # conv bias
        ],
        out_specs=pl.BlockSpec((tile_dst, c_pad), lambda i, j: (i, 0)),
        scratch_shapes=[pltpu.VMEM((tile_dst, 1), jnp.float32),       # running max
                        pltpu.VMEM((tile_dst, 1), jnp.float32),       # running denom
                        pltpu.VMEM((tile_dst, c_pad), jnp.float32)],  # running acc
        compiler_params=pltpu.CompilerParams(
            dimension_semantics=("parallel", "arbitrary"),
            vmem_limit_bytes=vmem_limit),
    )(a_dst, a_src_row, xl, bias_mat, b)


# --------------------------------------------------------------------------
# Kernel 3: readout (global max pool || global mean pool) + 2-layer MLP head.
#   mean pool = one MXU matmul (oh[B,N] @ x[N,C]) * 1/count
#   max  pool = per-graph masked sublane max (B small & static)
#   linear1's weight is pre-split into max-part / mean-part (no in-kernel cat).
# --------------------------------------------------------------------------
def _readout_mlp_kernel(x_ref, oh_ref, ohT_ref, inv_ref, w1m_ref, w1e_ref,
                        b1_ref, w2_ref, b2_ref, o_ref, *, num_graphs):
    x = x_ref[...]                                            # [N_pad, C_pad]
    mean_pool = jnp.dot(oh_ref[...], x,
                        preferred_element_type=jnp.float32) * inv_ref[...]

    ohT = ohT_ref[...]                                        # [N_pad, B]
    max_rows = []
    for g in range(num_graphs):
        m_g = ohT[:, g:g + 1] > 0.0
        max_rows.append(jnp.max(jnp.where(m_g, x, NEG), axis=0, keepdims=True))
    max_pool = jnp.concatenate(max_rows, axis=0)              # [B, C_pad]

    # linear1(cat([max, mean])) == max @ W1[:C] + mean @ W1[C:]
    hdn = (jnp.dot(max_pool, w1m_ref[...], preferred_element_type=jnp.float32)
           + jnp.dot(mean_pool, w1e_ref[...], preferred_element_type=jnp.float32)
           + b1_ref[...])
    hdn = jnp.maximum(hdn, 0.0)
    # TODO(synk): F.dropout(p=0.2) treated as identity (inference semantics).
    o_ref[...] = jnp.dot(hdn, w2_ref[...],
                         preferred_element_type=jnp.float32) + b2_ref[...]


def readout_mlp(x, oh, ohT, inv_cnt, w1m, w1e, b1, w2, b2, num_graphs, vmem_limit):
    # TODO(synk): for very large graphs, tile this over node blocks with
    # running max/sum accumulators instead of a single-block residency.
    out_pad = w2.shape[1]
    kernel = functools.partial(_readout_mlp_kernel, num_graphs=num_graphs)
    operands = (x, oh, ohT, inv_cnt, w1m, w1e, b1, w2, b2)
    return pl.pallas_call(
        kernel,
        out_shape=jax.ShapeDtypeStruct((num_graphs, out_pad), jnp.float32),
        grid=(1,),
        in_specs=[pl.BlockSpec(a.shape, lambda i: (0, 0)) for a in operands],
        out_specs=pl.BlockSpec((num_graphs, out_pad), lambda i: (0, 0)),
        compiler_params=pltpu.CompilerParams(
            dimension_semantics=("arbitrary",),
            vmem_limit_bytes=vmem_limit),
    )(*operands)


# --------------------------------------------------------------------------
# Parameters (deterministic synthetic init; shapes follow the torch module)
# --------------------------------------------------------------------------
def init_params(key, in_channels, hidden_channels, out_channels, edge_dim,
                num_layers):
    params = {"convs": []}
    f_in = in_channels
    c = hidden_channels
    for _ in range(num_layers):
        key, k0, k1, k2, k3, k4, k5 = jax.random.split(key, 7)
        conv = dict(
            w_src=jax.random.normal(k0, (f_in, c), jnp.float32) / jnp.sqrt(f_in),
            att_src=jax.random.normal(k1, (1, c), jnp.float32) * 0.1,
            att_dst=jax.random.normal(k2, (1, c), jnp.float32) * 0.1,
            att_edge=jax.random.normal(k3, (1, c), jnp.float32) * 0.1,
            w_edge=jax.random.normal(k4, (edge_dim, c), jnp.float32) / jnp.sqrt(edge_dim),
            bias=jax.random.normal(k5, (1, c), jnp.float32) * 0.01,
        )
        params["convs"].append(conv)
        f_in = c
    key, k1, k2, k3, k4 = jax.random.split(key, 5)
    h2 = hidden_channels // 2
    params["w1"] = jax.random.normal(k1, (2 * c, h2), jnp.float32) / jnp.sqrt(2 * c)
    params["b1"] = jax.random.normal(k2, (1, h2), jnp.float32) * 0.01
    params["w2"] = jax.random.normal(k3, (h2, out_channels), jnp.float32) / jnp.sqrt(h2)
    params["b2"] = jax.random.normal(k4, (1, out_channels), jnp.float32) * 0.01
    return params


# --------------------------------------------------------------------------
# Forward pass (glue in JAX, hot paths in Pallas)
# --------------------------------------------------------------------------
def gat_model_forward(params, x, edge_index, edge_attr, batch, num_graphs):
    n, f_in = x.shape
    c = params["convs"][0]["w_src"].shape[1]
    hid = params["w1"].shape[1]
    out_c = params["w2"].shape[1]

    vmem_limit = _vmem_limit_bytes()

    # Tile selection: 256 dst tile feeds the 256x256 MXU on v6e/v7x; the source
    # axis is tiled (online softmax) so per-step VMEM is O(T_dst*T_src), not O(N).
    if n >= 512:
        tile_dst, tile_src = 256, 512
        n_pad = _round_up(n, 512)
    elif n >= 256:
        tile_dst = 256
        n_pad = _round_up(n, 256)
        tile_src = n_pad
    else:
        n_pad = _round_up(n, 8)
        tile_dst = n_pad
        tile_src = n_pad

    f_in_pad = _round_up(f_in, LANE)
    c_pad = _round_up(c, LANE)
    hid_pad = _round_up(hid, LANE)
    out_pad = _round_up(out_c, LANE)

    src, dst = edge_index[0], edge_index[1]
    # PyG GATConv add_self_loops=True, fill_value='mean' approximated as the
    # global mean of edge_attr (matches the in-file reference).  Duplicate /
    # parallel edges are not representable in the dense formulation.
    mean_attr = jnp.mean(edge_attr, axis=0, keepdims=True)
    loop = jnp.arange(n, dtype=src.dtype)
    src_f = jnp.concatenate([src, loop])
    dst_f = jnp.concatenate([dst, loop])
    ea_f = jnp.concatenate([edge_attr, jnp.tile(mean_attr, (n, 1))], axis=0)

    # One bf16 [N_pad, N_pad] edge-bias matrix per layer (a_edge on edges,
    # -1e30 on non-edges -> adjacency mask folded in), built BEFORE the conv
    # loop so no XLA scatter sits between consecutive Pallas layer kernels.
    # bf16 halves the dominant O(N^2) HBM stream of the attention kernel.
    neg_mat = jnp.full((n_pad, n_pad), NEG, jnp.bfloat16)
    edge_biases = []
    for conv in params["convs"]:
        v_edge = jnp.dot(conv["w_edge"], conv["att_edge"].T)[:, 0]   # [edge_dim]
        a_edge = (ea_f @ v_edge).astype(jnp.bfloat16)                # tiny glue matvec
        edge_biases.append(neg_mat.at[dst_f, src_f].set(a_edge))

    # zero-pad node features to a lane-dense width (padding is inert)
    h = jnp.zeros((n_pad, f_in_pad), jnp.float32).at[:n, :f_in].set(x)

    # TODO(synk): per-graph block-diagonal src-tile skipping (scalar prefetch of
    # graph offsets) not implemented; every dst tile scans the full src range.
    for conv, bias_mat in zip(params["convs"], edge_biases):
        f_cur = conv["w_src"].shape[0]
        w = jnp.zeros((h.shape[1], c_pad), jnp.float32).at[:f_cur, :c].set(conv["w_src"])
        asrc = jnp.zeros((1, c_pad), jnp.float32).at[:, :c].set(conv["att_src"])
        adst = jnp.zeros((1, c_pad), jnp.float32).at[:, :c].set(conv["att_dst"])
        b = jnp.zeros((1, c_pad), jnp.float32).at[:, :c].set(conv["bias"])

        # hoisted projection: x @ W + attention dot-products, ONCE per layer
        xl, a_src_row, a_dst = gat_project(h, w, asrc, adst, tile_dst, vmem_limit)
        # flash-style attention + neighborhood aggregation + fused ReLU
        h = gat_attend(a_dst, a_src_row, xl, bias_mat, b,
                       tile_dst, tile_src, vmem_limit)

    # readout: node->graph one-hot; padded nodes belong to no graph
    batch_pad = jnp.concatenate([batch, jnp.full((n_pad - n,), -1, batch.dtype)])
    oh = (jnp.arange(num_graphs, dtype=batch.dtype)[:, None] ==
          batch_pad[None, :]).astype(jnp.float32)                    # [B, N_pad]
    ohT = oh.T                                                       # [N_pad, B]
    inv_cnt = 1.0 / jnp.sum(oh, axis=1, keepdims=True)               # [B, 1]

    w1_max, w1_mean = params["w1"][:c], params["w1"][c:]
    w1m = jnp.zeros((c_pad, hid_pad), jnp.float32).at[:c, :hid].set(w1_max)
    w1e = jnp.zeros((c_pad, hid_pad), jnp.float32).at[:c, :hid].set(w1_mean)
    b1 = jnp.zeros((1, hid_pad), jnp.float32).at[:, :hid].set(params["b1"])
    w2 = jnp.zeros((hid_pad, out_pad), jnp.float32).at[:hid, :out_c].set(params["w2"])
    b2 = jnp.zeros((1, out_pad), jnp.float32).at[:, :out_c].set(params["b2"])

    out = readout_mlp(h, oh, ohT, inv_cnt, w1m, w1e, b1, w2, b2,
                      num_graphs, vmem_limit)                        # Pallas
    return out[:, :out_c]


# --------------------------------------------------------------------------
# Pure-JAX reference (segment-op based, mirrors PyG GATConv) for verification
# --------------------------------------------------------------------------
def reference_forward(params, x, edge_index, edge_attr, batch, num_graphs):
    n = x.shape[0]
    src, dst = edge_index[0], edge_index[1]
    mean_attr = jnp.mean(edge_attr, axis=0, keepdims=True)
    loop = jnp.arange(n, dtype=src.dtype)
    src_f = jnp.concatenate([src, loop])
    dst_f = jnp.concatenate([dst, loop])
    ea_f = jnp.concatenate([edge_attr, jnp.tile(mean_attr, (n, 1))], axis=0)

    h = x
    for conv in params["convs"]:
        xl = h @ conv["w_src"]
        a_src = (xl * conv["att_src"]).sum(-1)
        a_dst = (xl * conv["att_dst"]).sum(-1)
        a_edge = ((ea_f @ conv["w_edge"]) * conv["att_edge"]).sum(-1)
        e = a_src[src_f] + a_dst[dst_f] + a_edge
        e = jnp.where(e > 0, e, 0.2 * e)
        e_max = jax.ops.segment_max(e, dst_f, num_segments=n)
        p = jnp.exp(e - e_max[dst_f])
        denom = jax.ops.segment_sum(p, dst_f, num_segments=n)
        alpha = p / denom[dst_f]
        out = jax.ops.segment_sum(alpha[:, None] * xl[src_f], dst_f,
                                  num_segments=n) + conv["bias"]
        h = jax.nn.relu(out)

    max_pool = jax.ops.segment_max(h, batch, num_segments=num_graphs)
    counts = jax.ops.segment_sum(jnp.ones((n, 1), jnp.float32), batch,
                                 num_segments=num_graphs)
    mean_pool = jax.ops.segment_sum(h, batch, num_segments=num_graphs) / counts
    pooled = jnp.concatenate([max_pool, mean_pool], axis=1)
    hm = jax.nn.relu(pooled @ params["w1"] + params["b1"])
    return hm @ params["w2"] + params["b2"]


# --------------------------------------------------------------------------
if __name__ == "__main__":
    in_channels, hidden_channels, out_channels = 8, 32, 2
    edge_dim, num_layers = 4, 2
    nodes_per_graph, num_graphs = 8, 2
    n = nodes_per_graph * num_graphs

    key = jax.random.PRNGKey(0)
    key, kx, ke, kp = jax.random.split(key, 4)
    x = jax.random.normal(kx, (n, in_channels), jnp.float32)

    # bidirectional ring within each graph (no self loops, no parallel edges)
    srcs, dsts = [], []
    for g in range(num_graphs):
        off = g * nodes_per_graph
        for i in range(nodes_per_graph):
            j = (i + 1) % nodes_per_graph
            srcs += [off + i, off + j]
            dsts += [off + j, off + i]
    edge_index = jnp.array([srcs, dsts], dtype=jnp.int32)
    edge_attr = jax.random.normal(ke, (edge_index.shape[1], edge_dim), jnp.float32)
    batch = jnp.repeat(jnp.arange(num_graphs, dtype=jnp.int32), nodes_per_graph)

    params = init_params(kp, in_channels, hidden_channels, out_channels,
                         edge_dim, num_layers)

    out = gat_model_forward(params, x, edge_index, edge_attr, batch, num_graphs)
    out = jax.block_until_ready(out)

    ref = reference_forward(params, x, edge_index, edge_attr, batch, num_graphs)
    assert out.shape == (num_graphs, out_channels)
    # tolerance covers the intentional bf16 MXU path (xl / attn / edge bias in
    # bf16) and pl.reciprocal(approx=True) in the softmax normalizer
    assert jnp.allclose(out, ref, rtol=5e-2, atol=2e-2), (out, ref)
    print("KERNEL_OK")
</pallas_src>

<mosaic_0001>
module attributes {stable_mosaic.version = 11 : i64} {
  func.func @_project_kernel(%arg0: i32, %arg1: memref<16x128xf32, #tpu.memory_space<vmem>>, %arg2: memref<128x128xf32, #tpu.memory_space<vmem>>, %arg3: memref<1x128xf32, #tpu.memory_space<vmem>>, %arg4: memref<1x128xf32, #tpu.memory_space<vmem>>, %arg5: memref<16x128xbf16, #tpu.memory_space<vmem>>, %arg6: memref<1x16xf32, #tpu.memory_space<vmem>>, %arg7: memref<16x1xf32, #tpu.memory_space<vmem>>) attributes {dimension_semantics = [#tpu.dimension_semantics<parallel>], iteration_bounds = array<i64: 1>, scalar_prefetch = 0 : i64, scratch_operands = 0 : i64, tpu.core_type = #tpu.core_type<tc>, window_params = [{transform_indices = @transform_0, window_bounds = array<i64: 16, 128>}, {pipeline_mode = #tpu.pipeline_mode<synchronous>, transform_indices = @transform_1, window_bounds = array<i64: 128, 128>}, {pipeline_mode = #tpu.pipeline_mode<synchronous>, transform_indices = @transform_2, window_bounds = array<i64: 1, 128>}, {pipeline_mode = #tpu.pipeline_mode<synchronous>, transform_indices = @transform_3, window_bounds = array<i64: 1, 128>}, {transform_indices = @transform_4, window_bounds = array<i64: 16, 128>}, {transform_indices = @transform_5, window_bounds = array<i64: 1, 16>}, {transform_indices = @transform_6, window_bounds = array<i64: 16, 1>}]} {
    %c0 = arith.constant 0 : index
    %c0_0 = arith.constant 0 : index
    %0 = vector.load %arg1[%c0, %c0_0] : memref<16x128xf32, #tpu.memory_space<vmem>>, vector<16x128xf32>
    %c0_1 = arith.constant 0 : index
    %c0_2 = arith.constant 0 : index
    %1 = vector.load %arg2[%c0_1, %c0_2] : memref<128x128xf32, #tpu.memory_space<vmem>>, vector<128x128xf32>
    %cst = arith.constant dense<0.000000e+00> : vector<16x128xf32>
    %2 = tpu.matmul %0, %1, %cst {dimension_numbers = #tpu.dot_dimension_numbers<[1], [0], [0], [1], [0, 0, 1, 1], [], []>} : vector<16x128xf32>, vector<128x128xf32>, vector<16x128xf32> -> vector<16x128xf32>
    %c0_3 = arith.constant 0 : index
    %c0_4 = arith.constant 0 : index
    %3 = vector.load %arg3[%c0_3, %c0_4] : memref<1x128xf32, #tpu.memory_space<vmem>>, vector<1x128xf32>
    %cst_5 = arith.constant dense<0.000000e+00> : vector<1x16xf32>
    %4 = tpu.matmul %3, %2, %cst_5 {dimension_numbers = #tpu.dot_dimension_numbers<[1], [1], [0], [0], [0, 0, 1, 0], [], []>} : vector<1x128xf32>, vector<16x128xf32>, vector<1x16xf32> -> vector<1x16xf32>
    %c0_6 = arith.constant 0 : index
    %c0_7 = arith.constant 0 : index
    %5 = vector.load %arg6[%c0_6, %c0_7] : memref<1x16xf32, #tpu.memory_space<vmem>>, vector<1x16xf32>
    tpu.vector_store %arg6[%c0_6, %c0_7], %4 {strides = array<i32>} : memref<1x16xf32, #tpu.memory_space<vmem>>, vector<1x16xf32>,
    %c0_8 = arith.constant 0 : index
    %c0_9 = arith.constant 0 : index
    %6 = vector.load %arg4[%c0_8, %c0_9] : memref<1x128xf32, #tpu.memory_space<vmem>>, vector<1x128xf32>
    %7 = vector.broadcast %6 : vector<1x128xf32> to vector<16x128xf32>
    %8 = arith.mulf %2, %7 : vector<16x128xf32>
    %cst_10 = arith.constant dense<0.000000e+00> : vector<16xf32>
    %9 = vector.multi_reduction <add>, %8, %cst_10 [1] : vector<16x128xf32> to vector<16xf32>
    %10 = vector.shape_cast %9 : vector<16xf32> to vector<16x1xf32>
    %c0_11 = arith.constant 0 : index
    %c0_12 = arith.constant 0 : index
    %11 = vector.load %arg7[%c0_11, %c0_12] : memref<16x1xf32, #tpu.memory_space<vmem>>, vector<16x1xf32>
    tpu.vector_store %arg7[%c0_11, %c0_12], %10 {strides = array<i32>} : memref<16x1xf32, #tpu.memory_space<vmem>>, vector<16x1xf32>,
    %12 = arith.truncf %2 : vector<16x128xf32> to vector<16x128xbf16>
    %c0_13 = arith.constant 0 : index
    %c0_14 = arith.constant 0 : index
    %13 = vector.load %arg5[%c0_13, %c0_14] : memref<16x128xbf16, #tpu.memory_space<vmem>>, vector<16x128xbf16>
    tpu.vector_store %arg5[%c0_13, %c0_14], %12 {strides = array<i32>} : memref<16x128xbf16, #tpu.memory_space<vmem>>, vector<16x128xbf16>,
    return
  }
  func.func @transform_0(%arg0: i32) -> (i32, i32) {
    %c0_i32 = arith.constant 0 : i32
    %c0_i32_0 = arith.constant 0 : i32
    return %arg0, %c0_i32 : i32, i32
  }
  func.func @transform_1(%arg0: i32) -> (i32, i32) {
    %c0_i32 = arith.constant 0 : i32
    %c0_i32_0 = arith.constant 0 : i32
    %c0_i32_1 = arith.constant 0 : i32
    return %c0_i32, %c0_i32_0 : i32, i32
  }
  func.func @transform_2(%arg0: i32) -> (i32, i32) {
    %c0_i32 = arith.constant 0 : i32
    %c0_i32_0 = arith.constant 0 : i32
    %c0_i32_1 = arith.constant 0 : i32
    return %c0_i32, %c0_i32_0 : i32, i32
  }
  func.func @transform_3(%arg0: i32) -> (i32, i32) {
    %c0_i32 = arith.constant 0 : i32
    %c0_i32_0 = arith.constant 0 : i32
    %c0_i32_1 = arith.constant 0 : i32
    return %c0_i32, %c0_i32_0 : i32, i32
  }
  func.func @transform_4(%arg0: i32) -> (i32, i32) {
    %c0_i32 = arith.constant 0 : i32
    %c0_i32_0 = arith.constant 0 : i32
    return %arg0, %c0_i32 : i32, i32
  }
  func.func @transform_5(%arg0: i32) -> (i32, i32) {
    %c0_i32 = arith.constant 0 : i32
    %c0_i32_0 = arith.constant 0 : i32
    return %c0_i32, %arg0 : i32, i32
  }
  func.func @transform_6(%arg0: i32) -> (i32, i32) {
    %c0_i32 = arith.constant 0 : i32
    %c0_i32_0 = arith.constant 0 : i32
    return %arg0, %c0_i32 : i32, i32
  }
}

</mosaic_0001>

<llo_original>
// kernel: tpu_custom_call.1
$region0: #{tpu_custom_call.1}
  #allocation0 [shape = 'u32[]', space=smem, size = 0x4, offset = 0x4, fixed_abs, tag = 'smem constant byte address 0x4 - core index']
  #allocation1 [shape = 'u32[144,128]{1,0:T(1,128)}', space=vmem, size = 0x12000, scoped, tag = 'internal scratch']
  %s0 = inlined_call_operand.hbm [shape: f32[16,128], index: 0, kind: input, shape index: {}]
  %s1 = inlined_call_operand.hbm [shape: f32[128,128], index: 1, kind: input, shape index: {}]
  %s2 = inlined_call_operand.vmem [shape: f32[1,128], index: 2, kind: input, shape index: {}]
  %s3 = inlined_call_operand.vmem [shape: f32[1,128], index: 3, kind: input, shape index: {}]
  %s4 = inlined_call_operand.hbm [shape: bf16[16,128], index: 4, kind: output, shape index: {0}]
  %s5 = inlined_call_operand.hbm [shape: f32[1,16], index: 5, kind: output, shape index: {1}]
  %s6 = inlined_call_operand.vmem [shape: f32[16,1], index: 6, kind: output, shape index: {2}]
  %7 = xla_tuple %s4, %s5, %s6
  %s8 = sld [smem:[#allocation0]]
  $region50: #{tpu_custom_call.1} parent=0
    _
  %s10 = ssub.s32 1, %s8
  %s11 = scalar_select 0, %s10, %s8
  $region1: #{tpu_custom_call.1} parent=0
    #allocation2 [shape = 'u8[8192]{0}', space=vmem, size = 0x2000, scoped, tag = 'input window, operand 0, single buffered']
    #allocation3 [shape = 's32[1]{0}', space=sflag, size = 0x4, scoped, tag = 'scoped memory for tpu_custom_call.1']
    #allocation4 [shape = 's32[1]{0}', space=sflag, size = 0x4, scoped, tag = 'scoped memory for tpu_custom_call.1']
    #allocation5 [shape = 'u8[65536]{0}', space=vmem, size = 0x10000, scoped, tag = 'input window, operand 1, single buffered']
    #allocation6 [shape = 's32[1]{0}', space=sflag, size = 0x4, scoped, tag = 'scoped memory for tpu_custom_call.1']
    #allocation7 [shape = 'u8[4096]{0}', space=vmem, size = 0x1000, scoped, tag = 'output window, operand 0, single buffered']
    #allocation8 [shape = 'u8[512]{0}', space=vmem, size = 0x400, scoped, tag = 'output window, operand 1, single buffered']
    #allocation9 [shape = 's32[1]{0}', space=sflag, size = 0x4, scoped, tag = 'scoped memory for tpu_custom_call.1']
    %12 = vsyncpa [#allocation3], 0
    %13 = vsyncpa [#allocation6], 0
    %14 = vsyncpa [#allocation4], 0
    %15 = vsyncpa [#allocation9], 0
    // Predicated region
    $region2: #{tpu_custom_call.1} parent=1 // pred_check
      _
    $region3: #{tpu_custom_call.1} parent=1 // pred_check_branch
      %17 = sbr.rel (0) target = $region5
    $region4: #{tpu_custom_call.1} parent=1 // pred_region
      %s19 = ssub.s32 256, 256
      %20 = vsyncadd [#allocation3], %s19
      %s21 = sshll.u32 [#allocation2], 4
      %s22 = int_to_ptr.vmem [resolvable:$true] %s21
      %27 = dma.hbm_to_vmem [thread:$0]  %s0, 256, %s22, [#allocation3], 128, 128, 8
    $region5: #{tpu_custom_call.1} parent=1 // pred_fallthru
      _
    // Predicated region
    $region6: #{tpu_custom_call.1} parent=1 // pred_check
      _
    $region7: #{tpu_custom_call.1} parent=1 // pred_check_branch
      %29 = sbr.rel (0) target = $region9
    $region8: #{tpu_custom_call.1} parent=1 // pred_region
      %s31 = ssub.s32 2048, 2048
      %32 = vsyncadd [#allocation6], %s31
      %s33 = sshll.u32 [#allocation5], 4
      %s34 = int_to_ptr.vmem [resolvable:$true] %s33
      %39 = dma.hbm_to_vmem [thread:$0]  %s1, 2048, %s34, [#allocation6], 128, 128, 8
    $region9: #{tpu_custom_call.1} parent=1 // pred_fallthru
      _
    // Predicated region
    $region10: #{tpu_custom_call.1} parent=1 // pred_check
      _
    $region11: #{tpu_custom_call.1} parent=1 // pred_check_branch
      %41 = sbr.rel (0) target = $region13
    $region12: #{tpu_custom_call.1} parent=1 // pred_region
      _
    $region13: #{tpu_custom_call.1} parent=1 // pred_fallthru
      _
    // Predicated region
    $region14: #{tpu_custom_call.1} parent=1 // pred_check
      _
    $region15: #{tpu_custom_call.1} parent=1 // pred_check_branch
      %43 = sbr.rel (0) target = $region17
    $region16: #{tpu_custom_call.1} parent=1 // pred_region
      _
    $region17: #{tpu_custom_call.1} parent=1 // pred_fallthru
      _
    // Predicated region
    $region18: #{tpu_custom_call.1} parent=1 // pred_check
      _
    $region19: #{tpu_custom_call.1} parent=1 // pred_check_branch
      %45 = sbr.rel (0) target = $region21
    $region20: #{tpu_custom_call.1} parent=1 // pred_region
      %46 = dma.done [#allocation3], 256
    $region21: #{tpu_custom_call.1} parent=1 // pred_fallthru
      _
    // Predicated region
    $region22: #{tpu_custom_call.1} parent=1 // pred_check
      _
    $region23: #{tpu_custom_call.1} parent=1 // pred_check_branch
      %48 = sbr.rel (0) target = $region25
    $region24: #{tpu_custom_call.1} parent=1 // pred_region
      %49 = dma.done [#allocation6], 2048
    $region25: #{tpu_custom_call.1} parent=1 // pred_fallthru
      _
    %v50 = vld [vmem:[#allocation2] sm:$0xff]
    %v51 = vld [vmem:[#allocation2 + $0x8] sm:$0xff]
    %v52 = vld [vmem:[#allocation5] sm:$0xff]
    %v53 = vld [vmem:[#allocation5 + $0x8] sm:$0xff]
    %v54 = vld [vmem:[#allocation5 + $0x10] sm:$0xff]
    %v55 = vld [vmem:[#allocation5 + $0x18] sm:$0xff]
    %v56 = vld [vmem:[#allocation5 + $0x20] sm:$0xff]
    %v57 = vld [vmem:[#allocation5 + $0x28] sm:$0xff]
    %v58 = vld [vmem:[#allocation5 + $0x30] sm:$0xff]
    %v59 = vld [vmem:[#allocation5 + $0x38] sm:$0xff]
    %v60 = vld [vmem:[#allocation5 + $0x40] sm:$0xff]
    %v61 = vld [vmem:[#allocation5 + $0x48] sm:$0xff]
    %v62 = vld [vmem:[#allocation5 + $0x50] sm:$0xff]
    %v63 = vld [vmem:[#allocation5 + $0x58] sm:$0xff]
    %v64 = vld [vmem:[#allocation5 + $0x60] sm:$0xff]
    %v65 = vld [vmem:[#allocation5 + $0x68] sm:$0xff]
    %v66 = vld [vmem:[#allocation5 + $0x70] sm:$0xff]
    %v67 = vld [vmem:[#allocation5 + $0x78] sm:$0xff]
    %68 = vmatprep.subr.mxu0 0.0
    %69 = vmatpush1.msra.mxu0 %v52
    %70 = vmatprep.subr.mxu0 0.0
    %71 = vmatpush1.msra.mxu0 %v53
    %72 = vmatprep.subr.mxu0 0.0
    %73 = vmatpush1.msra.mxu0 %v54
    %74 = vmatprep.subr.mxu0 0.0
    %75 = vmatpush1.msra.mxu0 %v55
    %76 = vmatprep.subr.mxu0 0.0
    %77 = vmatpush1.msra.mxu0 %v56
    %78 = vmatprep.subr.mxu0 0.0
    %79 = vmatpush1.msra.mxu0 %v57
    %80 = vmatprep.subr.mxu0 0.0
    %81 = vmatpush1.msra.mxu0 %v58
    %82 = vmatprep.subr.mxu0 0.0
    %83 = vmatpush1.msra.mxu0 %v59
    %84 = vmatprep.subr.mxu0 0.0
    %85 = vmatpush1.msra.mxu0 %v60
    %86 = vmatprep.subr.mxu0 0.0
    %87 = vmatpush1.msra.mxu0 %v61
    %88 = vmatprep.subr.mxu0 0.0
    %89 = vmatpush1.msra.mxu0 %v62
    %90 = vmatprep.subr.mxu0 0.0
    %91 = vmatpush1.msra.mxu0 %v63
    %92 = vmatprep.subr.mxu0 0.0
    %93 = vmatpush1.msra.mxu0 %v64
    %94 = vmatprep.subr.mxu0 0.0
    %95 = vmatpush1.msra.mxu0 %v65
    %96 = vmatprep.subr.mxu0 0.0
    %97 = vmatpush1.msra.mxu0 %v66
    %98 = vmatprep.subr.mxu0 0.0
    %99 = vmatpush1.msra.mxu0 %v67
    %100 = vmatprep.subr.mxu0 0.0
    %101 = vmatpush1.msra.mxu0 0.0
    %102 = vmatprep.subr.mxu0 0.0
    %103 = vmatpush1.msra.mxu0 0.0
    %104 = vmatprep.subr.mxu0 0.0
    %105 = vmatpush1.msra.mxu0 0.0
    %106 = vmatprep.subr.mxu0 0.0
    %107 = vmatpush1.msra.mxu0 0.0
    %108 = vmatprep.subr.mxu0 0.0
    %109 = vmatpush1.msra.mxu0 0.0
    %110 = vmatprep.subr.mxu0 0.0
    %111 = vmatpush1.msra.mxu0 0.0
    %112 = vmatprep.subr.mxu0 0.0
    %113 = vmatpush1.msra.mxu0 0.0
    %114 = vmatprep.subr.mxu0 0.0
    %115 = vmatpush1.msra.mxu0 0.0
    %116 = vmatprep.subr.mxu0 0.0
    %117 = vmatpush1.msra.mxu0 0.0
    %118 = vmatprep.subr.mxu0 0.0
    %119 = vmatpush1.msra.mxu0 0.0
    %120 = vmatprep.subr.mxu0 0.0
    %121 = vmatpush1.msra.mxu0 0.0
    %122 = vmatprep.subr.mxu0 0.0
    %123 = vmatpush1.msra.mxu0 0.0
    %124 = vmatprep.subr.mxu0 0.0
    %125 = vmatpush1.msra.mxu0 0.0
    %126 = vmatprep.subr.mxu0 0.0
    %127 = vmatpush1.msra.mxu0 0.0
    %128 = vmatprep.subr.mxu0 0.0
    %129 = vmatpush1.msra.mxu0 0.0
    %130 = vmatprep.subr.mxu0 0.0
    %131 = vmatpush1.msra.mxu0 0.0
    %132 = vmatprep.mubr.f32.mxu0 0.0
    %133 = vmatmul.mubr.f32.gmra.mrb[0].mxu0 %v50
    %v134 = vpop.f32.mrb[0].mxu0
    %v135 = vadd.f32 0.0, %v134
    %v136 = vpop.f32.mrb[0].mxu0
    %137 = vmatprep.mubr.f32.mxu0 0.0
    %138 = vmatmul.mubr.f32.gmra.mrb[0].mxu0 %v51
    %v139 = vpop.f32.mrb[0].mxu0
    %v140 = vadd.f32 0.0, %v139
    %v141 = vpop.f32.mrb[0].mxu0
    %142 = vdwg.mxu0
    %v143 = vld [vmem:[%s2] sm:$0x1]
    %144 = vmatprep.subr.mxu0 0.0
    %145 = vmatpush1.xpose.msra.mxu0 %v135
    %146 = vmatprep.subr.mxu0 0.0
    %147 = vmatpush1.xpose.msra.mxu0 %v140
    %148 = vmatprep.subr.mxu0 0.0
    %149 = vmatpush1.xpose.msra.mxu0 0.0
    %150 = vmatprep.subr.mxu0 0.0
    %151 = vmatpush1.xpose.msra.mxu0 0.0
    %152 = vmatprep.subr.mxu0 0.0
    %153 = vmatpush1.xpose.msra.mxu0 0.0
    %154 = vmatprep.subr.mxu0 0.0
    %155 = vmatpush1.xpose.msra.mxu0 0.0
    %156 = vmatprep.subr.mxu0 0.0
    %157 = vmatpush1.xpose.msra.mxu0 0.0
    %158 = vmatprep.subr.mxu0 0.0
    %159 = vmatpush1.xpose.msra.mxu0 0.0
    %160 = vmatprep.subr.mxu0 0.0
    %161 = vmatpush1.xpose.msra.mxu0 0.0
    %162 = vmatprep.subr.mxu0 0.0
    %163 = vmatpush1.xpose.msra.mxu0 0.0
    %164 = vmatprep.subr.mxu0 0.0
    %165 = vmatpush1.xpose.msra.mxu0 0.0
    %166 = vmatprep.subr.mxu0 0.0
    %167 = vmatpush1.xpose.msra.mxu0 0.0
    %168 = vmatprep.subr.mxu0 0.0
    %169 = vmatpush1.xpose.msra.mxu0 0.0
    %170 = vmatprep.subr.mxu0 0.0
    %171 = vmatpush1.xpose.msra.mxu0 0.0
    %172 = vmatprep.subr.mxu0 0.0
    %173 = vmatpush1.xpose.msra.mxu0 0.0
    %174 = vmatprep.subr.mxu0 0.0
    %175 = vmatpush1.xpose.msra.mxu0 0.0
    %176 = vmatprep.subr.mxu0 0.0
    %177 = vmatpush1.xpose.msra.mxu0 0.0
    %178 = vmatprep.subr.mxu0 0.0
    %179 = vmatpush1.xpose.msra.mxu0 0.0
    %180 = vmatprep.subr.mxu0 0.0
    %181 = vmatpush1.xpose.msra.mxu0 0.0
    %182 = vmatprep.subr.mxu0 0.0
    %183 = vmatpush1.xpose.msra.mxu0 0.0
    %184 = vmatprep.subr.mxu0 0.0
    %185 = vmatpush1.xpose.msra.mxu0 0.0
    %186 = vmatprep.subr.mxu0 0.0
    %187 = vmatpush1.xpose.msra.mxu0 0.0
    %188 = vmatprep.subr.mxu0 0.0
    %189 = vmatpush1.xpose.msra.mxu0 0.0
    %190 = vmatprep.subr.mxu0 0.0
    %191 = vmatpush1.xpose.msra.mxu0 0.0
    %192 = vmatprep.subr.mxu0 0.0
    %193 = vmatpush1.xpose.msra.mxu0 0.0
    %194 = vmatprep.subr.mxu0 0.0
    %195 = vmatpush1.xpose.msra.mxu0 0.0
    %196 = vmatprep.subr.mxu0 0.0
    %197 = vmatpush1.xpose.msra.mxu0 0.0
    %198 = vmatprep.subr.mxu0 0.0
    %199 = vmatpush1.xpose.msra.mxu0 0.0
    %200 = vmatprep.subr.mxu0 0.0
    %201 = vmatpush1.xpose.msra.mxu0 0.0
    %202 = vmatprep.subr.mxu0 0.0
    %203 = vmatpush1.xpose.msra.mxu0 0.0
    %204 = vmatprep.subr.mxu0 0.0
    %205 = vmatpush1.xpose.msra.mxu0 0.0
    %206 = vmatprep.subr.mxu0 0.0
    %207 = vmatpush1.xpose.msra.mxu0 0.0
    %208 = vmatprep.mubr.f32.mxu0 0.0
    %209 = vmatmul.mubr.f32.gmra.mrb[0].mxu0 %v143
    %v210 = vpop.f32.mrb[0].mxu0
    %v211 = vadd.f32 0.0, %v210
    %v212 = vpop.f32.mrb[0].mxu0
    %213 = vdwg.mxu0
    %vm214 = vcmask 122880
    %215 = vst.msk [vmem:[#allocation8] sm:$0x1] %vm214, %v211
    %v216 = vld [vmem:[%s3] sm:$0x1]
    %v218 = vlaneseq
    %v219 = vshrl.u32 %v218, 7
    %v220 = vsub.s32 0, %v219
    %v221 = vrot.slane %v216, %v220
    %v223 = vmul.f32 %v135, %v221
    %v224 = vmul.f32 %v140, %v221
    %225 = vadd.xlane.f32.xlu0 %v223
    %v226 = vpop.xlane.xlu0 %225
    %227 = vadd.xlane.f32.xlu0 %v224
    %v228 = vpop.xlane.xlu0 %227
    %vm229 = vcmask 7168
    %230 = vst.msk [vmem:[%s6] sm:$0xff] %vm229, %v226
    %231 = vst.msk [vmem:[%s6 + $0x8] sm:$0xff] %vm229, %v228
    %v232 = vpack.c.bf16 %v140, %v135
    %v234 = vunpack.c.l.b16 %v232
    %v235 = vunpack.c.h.b16 %v232
    %v236 = vpack.c.b16 %v234, %v234
    %v237 = vpack.c.b16 %v235, %v235
    %240 = vst [vmem:[#allocation7] sm:$0xf] %v236
    %241 = vst [vmem:[#allocation7 + $0x4] sm:$0xf] %v237
    // Predicated region
    $region26: #{tpu_custom_call.1} parent=1 // pred_check
      _
    $region27: #{tpu_custom_call.1} parent=1 // pred_check_branch
      %243 = sbr.rel (0) target = $region29
    $region28: #{tpu_custom_call.1} parent=1 // pred_region
      %s245 = ssub.s32 128, 128
      %246 = vsyncadd [#allocation4], %s245
      %s247 = sshll.u32 [#allocation7], 4
      %s248 = int_to_ptr.vmem [resolvable:$true] %s247
      %253 = dma.vmem_to_hbm [thread:$0]  %s248, 128, %s4, [#allocation4], 64, 64, 4
    $region29: #{tpu_custom_call.1} parent=1 // pred_fallthru
      _
    // Predicated region
    $region30: #{tpu_custom_call.1} parent=1 // pred_check
      _
    $region31: #{tpu_custom_call.1} parent=1 // pred_check_branch
      %255 = sbr.rel (0) target = $region33
    $region32: #{tpu_custom_call.1} parent=1 // pred_region
      %s257 = ssub.s32 16, 16
      %258 = vsyncadd [#allocation9], %s257
      %s260 = sshll.u32 [#allocation8], 4
      %s261 = int_to_ptr.vmem [resolvable:$true] %s260
      %263 = dma.vmem_to_hbm [thread:$0]  %s261, 16, %s5, [#allocation9]
    $region33: #{tpu_custom_call.1} parent=1 // pred_fallthru
      _
    // Predicated region
    $region34: #{tpu_custom_call.1} parent=1 // pred_check
      _
    $region35: #{tpu_custom_call.1} parent=1 // pred_check_branch
      %265 = sbr.rel (0) target = $region37
    $region36: #{tpu_custom_call.1} parent=1 // pred_region
      _
    $region37: #{tpu_custom_call.1} parent=1 // pred_fallthru
      _
    // Predicated region
    $region38: #{tpu_custom_call.1} parent=1 // pred_check
      _
    $region39: #{tpu_custom_call.1} parent=1 // pred_check_branch
      %267 = sbr.rel (0) target = $region41
    $region40: #{tpu_custom_call.1} parent=1 // pred_region
      %268 = dma.done [#allocation4], 128
    $region41: #{tpu_custom_call.1} parent=1 // pred_fallthru
      _
    // Predicated region
    $region42: #{tpu_custom_call.1} parent=1 // pred_check
      _
    $region43: #{tpu_custom_call.1} parent=1 // pred_check_branch
      %270 = sbr.rel (0) target = $region45
    $region44: #{tpu_custom_call.1} parent=1 // pred_region
      %271 = dma.done [#allocation9], 16
    $region45: #{tpu_custom_call.1} parent=1 // pred_fallthru
      _
    // Predicated region
    $region46: #{tpu_custom_call.1} parent=1 // pred_check
      _
    $region47: #{tpu_custom_call.1} parent=1 // pred_check_branch
      %273 = sbr.rel (0) target = $region49
    $region48: #{tpu_custom_call.1} parent=1 // pred_region
      _
    $region49: #{tpu_custom_call.1} parent=1 // pred_fallthru
      _
    %274 = vsyncpa [#allocation3], 1
    %275 = vsyncpa [#allocation6], 1
    %276 = vsyncpa [#allocation4], 1
    %277 = vsyncpa [#allocation9], 1

</llo_original>
